<compile_context>
chip_gen: v7x
topology: tpu7x:2x2x1
jax: 0.10.0
libtpu: 0.0.40
codegen_flags: <defaults>
</compile_context>

<pallas_src>
import functools
import math

import numpy as np
import jax
import jax.numpy as jnp
from jax import lax
from jax.experimental import pallas as pl
from jax.experimental.pallas import tpu as pltpu

# Lanczos approximation coefficients (g = 7, n = 9).
_LANCZOS_C0 = 0.99999999999980993
_LANCZOS_C = (
    676.5203681218851,
    -1259.1392167224028,
    771.32342877765313,
    -176.61502916214059,
    12.507343278686905,
    -0.13857109526572012,
    9.9843695780195716e-6,
    1.5056327351493116e-7,
)
_HALF_LOG_2PI = 0.9189385332046727  # 0.5 * log(2*pi)


def _lanczos_rational_coeffs():
    """Fold the 8 Lanczos partial fractions into one rational in w = 1/(z+1).

        sum_i c_i / (z + i) = w * M(w) / D(w)
        D(w) = prod_{m=1..7} (1 + m w)
        M(w) = c_1 * D(w) + sum_{i=2..8} c_i * prod_{m != i-1} (1 + m w)

    w in (0, 1] for z >= 0, so Horner evaluation in f32 is well conditioned and
    overflow-free for arbitrarily large z (unlike a direct polynomial in z).
    Coefficients are precomputed in float64 at import time.
    """
    c = np.asarray(_LANCZOS_C, dtype=np.float64)
    d = np.poly1d([1.0])
    for m in range(1, 8):
        d = d * np.poly1d([float(m), 1.0])          # (m*w + 1)
    mpoly = d * float(c[0])
    for i in range(2, 9):
        p = np.poly1d([1.0])
        for m in range(1, 8):
            if m != i - 1:
                p = p * np.poly1d([float(m), 1.0])
        mpoly = mpoly + p * float(c[i - 1])
    return tuple(float(v) for v in mpoly.coeffs), tuple(float(v) for v in d.coeffs)


_M_COEF, _D_COEF = _lanczos_rational_coeffs()


def _horner(w, coeffs):
    acc = jnp.full_like(w, coeffs[0])
    for c in coeffs[1:]:
        acc = acc * w + c
    return acc


def _lgamma_zp1(z):
    """lgamma(z + 1) for z >= 0. Single-rational Lanczos: 2 divides + 2 logs."""
    w = 1.0 / (1.0 + z)
    a = _LANCZOS_C0 + w * (_horner(w, _M_COEF) / _horner(w, _D_COEF))
    t = z + 7.5
    return _HALF_LOG_2PI + (z + 0.5) * jnp.log(t) - t + jnp.log(a)


def _lgamma_pos(z):
    """lgamma(z) for z > 0 via lgamma(z) = lgamma(z + 1) - log(z)."""
    return _lgamma_zp1(z) - jnp.log(z)


def _nb_neg_ll(k, m_log, r_log):
    """Elementwise -log NB(k; m = exp(m_log), r = exp(r_log))."""
    r = jnp.exp(r_log)
    # log(r + m) = logaddexp(r_log, m_log): one exp + one log.
    mx = jnp.maximum(r_log, m_log)
    log_rm = mx + jnp.log(1.0 + jnp.exp(-jnp.abs(r_log - m_log)))
    ll = (
        _lgamma_pos(k + r)
        - _lgamma_pos(r)
        - _lgamma_zp1(k)                      # lgamma(k + 1), no recurrence
        + r * (r_log - log_rm)
        + k * (m_log - log_rm)
    )
    return -ll


def _nb_elem_kernel(x_ref, mlog_ref, rlog_ref, out_ref):
    out_ref[...] = _nb_neg_ll(
        x_ref[...].astype(jnp.float32),
        mlog_ref[...].astype(jnp.float32),
        rlog_ref[...].astype(jnp.float32),
    ).astype(out_ref.dtype)


def _nb_psum_kernel(x_ref, mlog_ref, rlog_ref, psum_ref):
    ret = _nb_neg_ll(
        x_ref[...].astype(jnp.float32),
        mlog_ref[...].astype(jnp.float32),
        rlog_ref[...].astype(jnp.float32),
    )
    s = jnp.sum(ret)
    # Deposit the tile's partial sum at [0, 0] of an aligned (8, 128) block;
    # the global reduction (tree) is done by XLA on the tiny partials array.
    rows = lax.broadcasted_iota(jnp.int32, (8, 128), 0)
    cols = lax.broadcasted_iota(jnp.int32, (8, 128), 1)
    psum_ref[...] = jnp.where((rows == 0) & (cols == 0), s, 0.0).astype(psum_ref.dtype)


def _pick_tile(dim, unit, max_tile):
    """Largest tile <= max_tile that is a multiple of `unit` and divides `dim`
    exactly; falls back to the full dim (always a legal block extent)."""
    if dim <= max_tile:
        return dim
    t = (max_tile // unit) * unit
    while t >= unit:
        if dim % t == 0:
            return t
        t -= unit
    return dim


@functools.partial(jax.jit, static_argnames=("reduction",))
def negative_binomial_loss_log_ver(x, mean_log, r_log, reduction="sum"):
    """Pallas-backed equivalent of NegativeBinomialLossLogVer.forward."""
    assert x.shape == mean_log.shape == r_log.shape
    orig_shape = x.shape
    G = orig_shape[-1]
    B = max(1, math.prod(orig_shape[:-1]))
    x2 = x.reshape(B, G)
    m2 = mean_log.reshape(B, G)
    r2 = r_log.reshape(B, G)

    # Tiles: big enough to amortize per-step overhead, small enough that the
    # double-buffered working set (3 inputs [+1 output]) stays ~16 MiB.
    tile_b = _pick_tile(B, 8, 256)
    tile_g = _pick_tile(G, 128, 2048)
    nb, ng = B // tile_b, G // tile_g
    grid = (nb, ng)

    in_specs = [pl.BlockSpec((tile_b, tile_g), lambda i, j: (i, j)) for _ in range(3)]
    cparams = pltpu.CompilerParams(
        dimension_semantics=("parallel", "parallel"),
        vmem_limit_bytes=40 * 1024 * 1024,
    )
    n_elem = B * G
    in_bytes = n_elem * (x.dtype.itemsize + mean_log.dtype.itemsize + r_log.dtype.itemsize)

    if reduction is None:
        cost = pl.CostEstimate(
            flops=80 * n_elem,
            transcendentals=17 * n_elem,
            bytes_accessed=in_bytes + n_elem * 4,
        )
        elem = pl.pallas_call(
            _nb_elem_kernel,
            out_shape=jax.ShapeDtypeStruct((B, G), jnp.float32),
            grid_spec=pltpu.PrefetchScalarGridSpec(
                num_scalar_prefetch=0,
                grid=grid,
                in_specs=in_specs,
                out_specs=pl.BlockSpec((tile_b, tile_g), lambda i, j: (i, j)),
            ),
            compiler_params=cparams,
            cost_estimate=cost,
        )(x2, m2, r2)
        return elem.reshape(orig_shape)

    cost = pl.CostEstimate(
        flops=80 * n_elem,
        transcendentals=17 * n_elem,
        bytes_accessed=in_bytes + nb * ng * 8 * 128 * 4,
    )
    partials = pl.pallas_call(
        _nb_psum_kernel,
        out_shape=jax.ShapeDtypeStruct((nb * 8, ng * 128), jnp.float32),
        grid_spec=pltpu.PrefetchScalarGridSpec(
            num_scalar_prefetch=0,
            grid=grid,
            in_specs=in_specs,
            out_specs=pl.BlockSpec((8, 128), lambda i, j: (i, j)),
        ),
        compiler_params=cparams,
        cost_estimate=cost,
    )(x2, m2, r2)
    total = jnp.sum(partials)
    if reduction == "mean":
        return total / jnp.float32(n_elem)
    # default 'sum': torch.mean(ret, dim=-1).sum() == sum(ret) / G
    return total / jnp.float32(G)


def _reference(x, mean_log, r_log, reduction="sum"):
    """Pure-JAX reference mirroring the PyTorch module semantics."""
    r = jnp.exp(r_log)
    log_rm = jnp.logaddexp(r_log, mean_log)
    ll = (
        jax.scipy.special.gammaln(x + r)
        - jax.scipy.special.gammaln(r)
        - jax.scipy.special.gammaln(x + 1.0)
        + r * (r_log - log_rm)
        + x * (mean_log - log_rm)
    )
    ret = -ll
    if reduction is None:
        return ret
    if reduction == "mean":
        return jnp.mean(ret)
    return jnp.mean(ret, axis=-1).sum()


if __name__ == "__main__":
    key = jax.random.PRNGKey(0)
    k1, k2, k3 = jax.random.split(key, 3)

    B, G = 16, 256  # small demo shapes: (batch, genes)
    x = jax.random.poisson(k1, 2.0, (B, G)).astype(jnp.float32)
    mean_log = jax.random.normal(k2, (B, G), dtype=jnp.float32)
    r_log = jax.random.normal(k3, (B, G), dtype=jnp.float32)

    # default reduction='sum'
    loss = negative_binomial_loss_log_ver(x, mean_log, r_log, reduction="sum")
    jax.block_until_ready(loss)
    ref = _reference(x, mean_log, r_log, reduction="sum")
    assert jnp.allclose(loss, ref, rtol=1e-2, atol=1e-2), (loss, ref)

    # reduction='mean'
    loss_m = negative_binomial_loss_log_ver(x, mean_log, r_log, reduction="mean")
    jax.block_until_ready(loss_m)
    ref_m = _reference(x, mean_log, r_log, reduction="mean")
    assert jnp.allclose(loss_m, ref_m, rtol=1e-2, atol=1e-2), (loss_m, ref_m)

    # reduction=None (elementwise)
    loss_e = negative_binomial_loss_log_ver(x, mean_log, r_log, reduction=None)
    jax.block_until_ready(loss_e)
    ref_e = _reference(x, mean_log, r_log, reduction=None)
    assert jnp.allclose(loss_e, ref_e, rtol=1e-2, atol=1e-2)

    print("KERNEL_OK")
</pallas_src>

<mosaic_0001>
module attributes {stable_mosaic.version = 11 : i64} {
  func.func @_nb_psum_kernel(%arg0: i32, %arg1: i32, %arg2: memref<16x256xf32, #tpu.memory_space<vmem>>, %arg3: memref<16x256xf32, #tpu.memory_space<vmem>>, %arg4: memref<16x256xf32, #tpu.memory_space<vmem>>, %arg5: memref<8x128xf32, #tpu.memory_space<vmem>>) attributes {dimension_semantics = [#tpu.dimension_semantics<parallel>, #tpu.dimension_semantics<parallel>], iteration_bounds = array<i64: 1, 1>, scalar_prefetch = 0 : i64, scratch_operands = 0 : i64, tpu.core_type = #tpu.core_type<tc>, window_params = [{transform_indices = @transform_0, window_bounds = array<i64: 16, 256>}, {transform_indices = @transform_1, window_bounds = array<i64: 16, 256>}, {transform_indices = @transform_2, window_bounds = array<i64: 16, 256>}, {transform_indices = @transform_3, window_bounds = array<i64: 8, 128>}]} {
    %c0 = arith.constant 0 : index
    %c0_0 = arith.constant 0 : index
    %0 = vector.load %arg2[%c0, %c0_0] : memref<16x256xf32, #tpu.memory_space<vmem>>, vector<16x256xf32>
    %c0_1 = arith.constant 0 : index
    %c0_2 = arith.constant 0 : index
    %1 = vector.load %arg3[%c0_1, %c0_2] : memref<16x256xf32, #tpu.memory_space<vmem>>, vector<16x256xf32>
    %c0_3 = arith.constant 0 : index
    %c0_4 = arith.constant 0 : index
    %2 = vector.load %arg4[%c0_3, %c0_4] : memref<16x256xf32, #tpu.memory_space<vmem>>, vector<16x256xf32>
    %3 = math.exp %2 : vector<16x256xf32>
    %4 = arith.maximumf %2, %1 : vector<16x256xf32>
    %5 = arith.subf %2, %1 : vector<16x256xf32>
    %6 = math.absf %5 : vector<16x256xf32>
    %cst = arith.constant 0.000000e+00 : f32
    %7 = vector.broadcast %cst : f32 to vector<16x256xf32>
    %8 = arith.subf %7, %6 : vector<16x256xf32>
    %9 = math.exp %8 : vector<16x256xf32>
    %cst_5 = arith.constant 1.000000e+00 : f32
    %10 = vector.broadcast %cst_5 : f32 to vector<16x256xf32>
    %11 = arith.addf %10, %9 : vector<16x256xf32>
    %12 = math.log %11 : vector<16x256xf32>
    %13 = arith.addf %4, %12 : vector<16x256xf32>
    %14 = arith.addf %0, %3 : vector<16x256xf32>
    %cst_6 = arith.constant 1.000000e+00 : f32
    %15 = vector.broadcast %cst_6 : f32 to vector<16x256xf32>
    %16 = arith.addf %15, %14 : vector<16x256xf32>
    %cst_7 = arith.constant 1.000000e+00 : f32
    %17 = vector.broadcast %cst_7 : f32 to vector<16x256xf32>
    %18 = arith.divf %17, %16 : vector<16x256xf32>
    %cst_8 = arith.constant 3409662.75 : f32
    %19 = vector.broadcast %cst_8 : f32 to vector<16x256xf32>
    %20 = arith.mulf %19, %18 : vector<16x256xf32>
    %cst_9 = arith.constant 0x4A7DBE90 : f32
    %21 = vector.broadcast %cst_9 : f32 to vector<16x256xf32>
    %22 = arith.addf %20, %21 : vector<16x256xf32>
    %23 = arith.mulf %22, %18 : vector<16x256xf32>
    %cst_10 = arith.constant 2209812.5 : f32
    %24 = vector.broadcast %cst_10 : f32 to vector<16x256xf32>
    %25 = arith.addf %23, %24 : vector<16x256xf32>
    %26 = arith.mulf %25, %18 : vector<16x256xf32>
    %cst_11 = arith.constant 665157.688 : f32
    %27 = vector.broadcast %cst_11 : f32 to vector<16x256xf32>
    %28 = arith.addf %26, %27 : vector<16x256xf32>
    %29 = arith.mulf %28, %18 : vector<16x256xf32>
    %cst_12 = arith.constant 122578.258 : f32
    %30 = vector.broadcast %cst_12 : f32 to vector<16x256xf32>
    %31 = arith.addf %29, %30 : vector<16x256xf32>
    %32 = arith.mulf %31, %18 : vector<16x256xf32>
    %cst_13 = arith.constant 13824.8809 : f32
    %33 = vector.broadcast %cst_13 : f32 to vector<16x256xf32>
    %34 = arith.addf %32, %33 : vector<16x256xf32>
    %35 = arith.mulf %34, %18 : vector<16x256xf32>
    %cst_14 = arith.constant 881.834228 : f32
    %36 = vector.broadcast %cst_14 : f32 to vector<16x256xf32>
    %37 = arith.addf %35, %36 : vector<16x256xf32>
    %38 = arith.mulf %37, %18 : vector<16x256xf32>
    %cst_15 = arith.constant 24.458334 : f32
    %39 = vector.broadcast %cst_15 : f32 to vector<16x256xf32>
    %40 = arith.addf %38, %39 : vector<16x256xf32>
    %cst_16 = arith.constant 5.040000e+03 : f32
    %41 = vector.broadcast %cst_16 : f32 to vector<16x256xf32>
    %42 = arith.mulf %41, %18 : vector<16x256xf32>
    %cst_17 = arith.constant 1.306800e+04 : f32
    %43 = vector.broadcast %cst_17 : f32 to vector<16x256xf32>
    %44 = arith.addf %42, %43 : vector<16x256xf32>
    %45 = arith.mulf %44, %18 : vector<16x256xf32>
    %cst_18 = arith.constant 1.313200e+04 : f32
    %46 = vector.broadcast %cst_18 : f32 to vector<16x256xf32>
    %47 = arith.addf %45, %46 : vector<16x256xf32>
    %48 = arith.mulf %47, %18 : vector<16x256xf32>
    %cst_19 = arith.constant 6.769000e+03 : f32
    %49 = vector.broadcast %cst_19 : f32 to vector<16x256xf32>
    %50 = arith.addf %48, %49 : vector<16x256xf32>
    %51 = arith.mulf %50, %18 : vector<16x256xf32>
    %cst_20 = arith.constant 1.960000e+03 : f32
    %52 = vector.broadcast %cst_20 : f32 to vector<16x256xf32>
    %53 = arith.addf %51, %52 : vector<16x256xf32>
    %54 = arith.mulf %53, %18 : vector<16x256xf32>
    %cst_21 = arith.constant 3.220000e+02 : f32
    %55 = vector.broadcast %cst_21 : f32 to vector<16x256xf32>
    %56 = arith.addf %54, %55 : vector<16x256xf32>
    %57 = arith.mulf %56, %18 : vector<16x256xf32>
    %cst_22 = arith.constant 2.800000e+01 : f32
    %58 = vector.broadcast %cst_22 : f32 to vector<16x256xf32>
    %59 = arith.addf %57, %58 : vector<16x256xf32>
    %60 = arith.mulf %59, %18 : vector<16x256xf32>
    %cst_23 = arith.constant 1.000000e+00 : f32
    %61 = vector.broadcast %cst_23 : f32 to vector<16x256xf32>
    %62 = arith.addf %60, %61 : vector<16x256xf32>
    %63 = arith.divf %40, %62 : vector<16x256xf32>
    %64 = arith.mulf %18, %63 : vector<16x256xf32>
    %cst_24 = arith.constant 1.000000e+00 : f32
    %65 = vector.broadcast %cst_24 : f32 to vector<16x256xf32>
    %66 = arith.addf %65, %64 : vector<16x256xf32>
    %cst_25 = arith.constant 7.500000e+00 : f32
    %67 = vector.broadcast %cst_25 : f32 to vector<16x256xf32>
    %68 = arith.addf %14, %67 : vector<16x256xf32>
    %cst_26 = arith.constant 5.000000e-01 : f32
    %69 = vector.broadcast %cst_26 : f32 to vector<16x256xf32>
    %70 = arith.addf %14, %69 : vector<16x256xf32>
    %71 = math.log %68 : vector<16x256xf32>
    %72 = arith.mulf %70, %71 : vector<16x256xf32>
    %cst_27 = arith.constant 0.918938517 : f32
    %73 = vector.broadcast %cst_27 : f32 to vector<16x256xf32>
    %74 = arith.addf %73, %72 : vector<16x256xf32>
    %75 = arith.subf %74, %68 : vector<16x256xf32>
    %76 = math.log %66 : vector<16x256xf32>
    %77 = arith.addf %75, %76 : vector<16x256xf32>
    %78 = math.log %14 : vector<16x256xf32>
    %79 = arith.subf %77, %78 : vector<16x256xf32>
    %cst_28 = arith.constant 1.000000e+00 : f32
    %80 = vector.broadcast %cst_28 : f32 to vector<16x256xf32>
    %81 = arith.addf %80, %3 : vector<16x256xf32>
    %cst_29 = arith.constant 1.000000e+00 : f32
    %82 = vector.broadcast %cst_29 : f32 to vector<16x256xf32>
    %83 = arith.divf %82, %81 : vector<16x256xf32>
    %cst_30 = arith.constant 3409662.75 : f32
    %84 = vector.broadcast %cst_30 : f32 to vector<16x256xf32>
    %85 = arith.mulf %84, %83 : vector<16x256xf32>
    %cst_31 = arith.constant 0x4A7DBE90 : f32
    %86 = vector.broadcast %cst_31 : f32 to vector<16x256xf32>
    %87 = arith.addf %85, %86 : vector<16x256xf32>
    %88 = arith.mulf %87, %83 : vector<16x256xf32>
    %cst_32 = arith.constant 2209812.5 : f32
    %89 = vector.broadcast %cst_32 : f32 to vector<16x256xf32>
    %90 = arith.addf %88, %89 : vector<16x256xf32>
    %91 = arith.mulf %90, %83 : vector<16x256xf32>
    %cst_33 = arith.constant 665157.688 : f32
    %92 = vector.broadcast %cst_33 : f32 to vector<16x256xf32>
    %93 = arith.addf %91, %92 : vector<16x256xf32>
    %94 = arith.mulf %93, %83 : vector<16x256xf32>
    %cst_34 = arith.constant 122578.258 : f32
    %95 = vector.broadcast %cst_34 : f32 to vector<16x256xf32>
    %96 = arith.addf %94, %95 : vector<16x256xf32>
    %97 = arith.mulf %96, %83 : vector<16x256xf32>
    %cst_35 = arith.constant 13824.8809 : f32
    %98 = vector.broadcast %cst_35 : f32 to vector<16x256xf32>
    %99 = arith.addf %97, %98 : vector<16x256xf32>
    %100 = arith.mulf %99, %83 : vector<16x256xf32>
    %cst_36 = arith.constant 881.834228 : f32
    %101 = vector.broadcast %cst_36 : f32 to vector<16x256xf32>
    %102 = arith.addf %100, %101 : vector<16x256xf32>
    %103 = arith.mulf %102, %83 : vector<16x256xf32>
    %cst_37 = arith.constant 24.458334 : f32
    %104 = vector.broadcast %cst_37 : f32 to vector<16x256xf32>
    %105 = arith.addf %103, %104 : vector<16x256xf32>
    %cst_38 = arith.constant 5.040000e+03 : f32
    %106 = vector.broadcast %cst_38 : f32 to vector<16x256xf32>
    %107 = arith.mulf %106, %83 : vector<16x256xf32>
    %cst_39 = arith.constant 1.306800e+04 : f32
    %108 = vector.broadcast %cst_39 : f32 to vector<16x256xf32>
    %109 = arith.addf %107, %108 : vector<16x256xf32>
    %110 = arith.mulf %109, %83 : vector<16x256xf32>
    %cst_40 = arith.constant 1.313200e+04 : f32
    %111 = vector.broadcast %cst_40 : f32 to vector<16x256xf32>
    %112 = arith.addf %110, %111 : vector<16x256xf32>
    %113 = arith.mulf %112, %83 : vector<16x256xf32>
    %cst_41 = arith.constant 6.769000e+03 : f32
    %114 = vector.broadcast %cst_41 : f32 to vector<16x256xf32>
    %115 = arith.addf %113, %114 : vector<16x256xf32>
    %116 = arith.mulf %115, %83 : vector<16x256xf32>
    %cst_42 = arith.constant 1.960000e+03 : f32
    %117 = vector.broadcast %cst_42 : f32 to vector<16x256xf32>
    %118 = arith.addf %116, %117 : vector<16x256xf32>
    %119 = arith.mulf %118, %83 : vector<16x256xf32>
    %cst_43 = arith.constant 3.220000e+02 : f32
    %120 = vector.broadcast %cst_43 : f32 to vector<16x256xf32>
    %121 = arith.addf %119, %120 : vector<16x256xf32>
    %122 = arith.mulf %121, %83 : vector<16x256xf32>
    %cst_44 = arith.constant 2.800000e+01 : f32
    %123 = vector.broadcast %cst_44 : f32 to vector<16x256xf32>
    %124 = arith.addf %122, %123 : vector<16x256xf32>
    %125 = arith.mulf %124, %83 : vector<16x256xf32>
    %cst_45 = arith.constant 1.000000e+00 : f32
    %126 = vector.broadcast %cst_45 : f32 to vector<16x256xf32>
    %127 = arith.addf %125, %126 : vector<16x256xf32>
    %128 = arith.divf %105, %127 : vector<16x256xf32>
    %129 = arith.mulf %83, %128 : vector<16x256xf32>
    %cst_46 = arith.constant 1.000000e+00 : f32
    %130 = vector.broadcast %cst_46 : f32 to vector<16x256xf32>
    %131 = arith.addf %130, %129 : vector<16x256xf32>
    %cst_47 = arith.constant 7.500000e+00 : f32
    %132 = vector.broadcast %cst_47 : f32 to vector<16x256xf32>
    %133 = arith.addf %3, %132 : vector<16x256xf32>
    %cst_48 = arith.constant 5.000000e-01 : f32
    %134 = vector.broadcast %cst_48 : f32 to vector<16x256xf32>
    %135 = arith.addf %3, %134 : vector<16x256xf32>
    %136 = math.log %133 : vector<16x256xf32>
    %137 = arith.mulf %135, %136 : vector<16x256xf32>
    %cst_49 = arith.constant 0.918938517 : f32
    %138 = vector.broadcast %cst_49 : f32 to vector<16x256xf32>
    %139 = arith.addf %138, %137 : vector<16x256xf32>
    %140 = arith.subf %139, %133 : vector<16x256xf32>
    %141 = math.log %131 : vector<16x256xf32>
    %142 = arith.addf %140, %141 : vector<16x256xf32>
    %143 = math.log %3 : vector<16x256xf32>
    %144 = arith.subf %142, %143 : vector<16x256xf32>
    %145 = arith.subf %79, %144 : vector<16x256xf32>
    %cst_50 = arith.constant 1.000000e+00 : f32
    %146 = vector.broadcast %cst_50 : f32 to vector<16x256xf32>
    %147 = arith.addf %146, %0 : vector<16x256xf32>
    %cst_51 = arith.constant 1.000000e+00 : f32
    %148 = vector.broadcast %cst_51 : f32 to vector<16x256xf32>
    %149 = arith.divf %148, %147 : vector<16x256xf32>
    %cst_52 = arith.constant 3409662.75 : f32
    %150 = vector.broadcast %cst_52 : f32 to vector<16x256xf32>
    %151 = arith.mulf %150, %149 : vector<16x256xf32>
    %cst_53 = arith.constant 0x4A7DBE90 : f32
    %152 = vector.broadcast %cst_53 : f32 to vector<16x256xf32>
    %153 = arith.addf %151, %152 : vector<16x256xf32>
    %154 = arith.mulf %153, %149 : vector<16x256xf32>
    %cst_54 = arith.constant 2209812.5 : f32
    %155 = vector.broadcast %cst_54 : f32 to vector<16x256xf32>
    %156 = arith.addf %154, %155 : vector<16x256xf32>
    %157 = arith.mulf %156, %149 : vector<16x256xf32>
    %cst_55 = arith.constant 665157.688 : f32
    %158 = vector.broadcast %cst_55 : f32 to vector<16x256xf32>
    %159 = arith.addf %157, %158 : vector<16x256xf32>
    %160 = arith.mulf %159, %149 : vector<16x256xf32>
    %cst_56 = arith.constant 122578.258 : f32
    %161 = vector.broadcast %cst_56 : f32 to vector<16x256xf32>
    %162 = arith.addf %160, %161 : vector<16x256xf32>
    %163 = arith.mulf %162, %149 : vector<16x256xf32>
    %cst_57 = arith.constant 13824.8809 : f32
    %164 = vector.broadcast %cst_57 : f32 to vector<16x256xf32>
    %165 = arith.addf %163, %164 : vector<16x256xf32>
    %166 = arith.mulf %165, %149 : vector<16x256xf32>
    %cst_58 = arith.constant 881.834228 : f32
    %167 = vector.broadcast %cst_58 : f32 to vector<16x256xf32>
    %168 = arith.addf %166, %167 : vector<16x256xf32>
    %169 = arith.mulf %168, %149 : vector<16x256xf32>
    %cst_59 = arith.constant 24.458334 : f32
    %170 = vector.broadcast %cst_59 : f32 to vector<16x256xf32>
    %171 = arith.addf %169, %170 : vector<16x256xf32>
    %cst_60 = arith.constant 5.040000e+03 : f32
    %172 = vector.broadcast %cst_60 : f32 to vector<16x256xf32>
    %173 = arith.mulf %172, %149 : vector<16x256xf32>
    %cst_61 = arith.constant 1.306800e+04 : f32
    %174 = vector.broadcast %cst_61 : f32 to vector<16x256xf32>
    %175 = arith.addf %173, %174 : vector<16x256xf32>
    %176 = arith.mulf %175, %149 : vector<16x256xf32>
    %cst_62 = arith.constant 1.313200e+04 : f32
    %177 = vector.broadcast %cst_62 : f32 to vector<16x256xf32>
    %178 = arith.addf %176, %177 : vector<16x256xf32>
    %179 = arith.mulf %178, %149 : vector<16x256xf32>
    %cst_63 = arith.constant 6.769000e+03 : f32
    %180 = vector.broadcast %cst_63 : f32 to vector<16x256xf32>
    %181 = arith.addf %179, %180 : vector<16x256xf32>
    %182 = arith.mulf %181, %149 : vector<16x256xf32>
    %cst_64 = arith.constant 1.960000e+03 : f32
    %183 = vector.broadcast %cst_64 : f32 to vector<16x256xf32>
    %184 = arith.addf %182, %183 : vector<16x256xf32>
    %185 = arith.mulf %184, %149 : vector<16x256xf32>
    %cst_65 = arith.constant 3.220000e+02 : f32
    %186 = vector.broadcast %cst_65 : f32 to vector<16x256xf32>
    %187 = arith.addf %185, %186 : vector<16x256xf32>
    %188 = arith.mulf %187, %149 : vector<16x256xf32>
    %cst_66 = arith.constant 2.800000e+01 : f32
    %189 = vector.broadcast %cst_66 : f32 to vector<16x256xf32>
    %190 = arith.addf %188, %189 : vector<16x256xf32>
    %191 = arith.mulf %190, %149 : vector<16x256xf32>
    %cst_67 = arith.constant 1.000000e+00 : f32
    %192 = vector.broadcast %cst_67 : f32 to vector<16x256xf32>
    %193 = arith.addf %191, %192 : vector<16x256xf32>
    %194 = arith.divf %171, %193 : vector<16x256xf32>
    %195 = arith.mulf %149, %194 : vector<16x256xf32>
    %cst_68 = arith.constant 1.000000e+00 : f32
    %196 = vector.broadcast %cst_68 : f32 to vector<16x256xf32>
    %197 = arith.addf %196, %195 : vector<16x256xf32>
    %cst_69 = arith.constant 7.500000e+00 : f32
    %198 = vector.broadcast %cst_69 : f32 to vector<16x256xf32>
    %199 = arith.addf %0, %198 : vector<16x256xf32>
    %cst_70 = arith.constant 5.000000e-01 : f32
    %200 = vector.broadcast %cst_70 : f32 to vector<16x256xf32>
    %201 = arith.addf %0, %200 : vector<16x256xf32>
    %202 = math.log %199 : vector<16x256xf32>
    %203 = arith.mulf %201, %202 : vector<16x256xf32>
    %cst_71 = arith.constant 0.918938517 : f32
    %204 = vector.broadcast %cst_71 : f32 to vector<16x256xf32>
    %205 = arith.addf %204, %203 : vector<16x256xf32>
    %206 = arith.subf %205, %199 : vector<16x256xf32>
    %207 = math.log %197 : vector<16x256xf32>
    %208 = arith.addf %206, %207 : vector<16x256xf32>
    %209 = arith.subf %145, %208 : vector<16x256xf32>
    %210 = arith.subf %2, %13 : vector<16x256xf32>
    %211 = arith.mulf %3, %210 : vector<16x256xf32>
    %212 = arith.addf %209, %211 : vector<16x256xf32>
    %213 = arith.subf %1, %13 : vector<16x256xf32>
    %214 = arith.mulf %0, %213 : vector<16x256xf32>
    %215 = arith.addf %212, %214 : vector<16x256xf32>
    %cst_72 = arith.constant 0.000000e+00 : f32
    %216 = vector.broadcast %cst_72 : f32 to vector<16x256xf32>
    %217 = arith.subf %216, %215 : vector<16x256xf32>
    %218 = vector.shape_cast %217 : vector<16x256xf32> to vector<1x16x256xf32>
    %cst_73 = arith.constant dense<0.000000e+00> : vector<1xf32>
    %219 = vector.multi_reduction <add>, %218, %cst_73 [1, 2] : vector<1x16x256xf32> to vector<1xf32>
    %220 = vector.shape_cast %219 : vector<1xf32> to vector<1x1x1xf32>
    %221 = vector.extract %220[0, 0, 0] : f32 from vector<1x1x1xf32>
    %222 = tpu.iota {dimensions = array<i32: 0>} : vector<8x128xi32>
    %223 = tpu.iota {dimensions = array<i32: 1>} : vector<8x128xi32>
    %c0_i32 = arith.constant 0 : i32
    %224 = vector.broadcast %c0_i32 : i32 to vector<8x128xi32>
    %225 = arith.cmpi eq, %222, %224 : vector<8x128xi32>
    %c0_i32_74 = arith.constant 0 : i32
    %226 = vector.broadcast %c0_i32_74 : i32 to vector<8x128xi32>
    %227 = arith.cmpi eq, %223, %226 : vector<8x128xi32>
    %228 = arith.andi %225, %227 : vector<8x128xi1>
    %cst_75 = arith.constant 0.000000e+00 : f32
    %229 = vector.broadcast %221 : f32 to vector<8x128xf32>
    %230 = vector.broadcast %cst_75 : f32 to vector<8x128xf32>
    %231 = arith.select %228, %229, %230 : vector<8x128xi1>, vector<8x128xf32>
    %c0_76 = arith.constant 0 : index
    %c0_77 = arith.constant 0 : index
    %232 = vector.load %arg5[%c0_76, %c0_77] : memref<8x128xf32, #tpu.memory_space<vmem>>, vector<8x128xf32>
    tpu.vector_store %arg5[%c0_76, %c0_77], %231 {strides = array<i32>} : memref<8x128xf32, #tpu.memory_space<vmem>>, vector<8x128xf32>,
    return
  }
  func.func @transform_0(%arg0: i32, %arg1: i32) -> (i32, i32) {
    %c0_i32 = arith.constant 0 : i32
    return %arg0, %arg1 : i32, i32
  }
  func.func @transform_1(%arg0: i32, %arg1: i32) -> (i32, i32) {
    %c0_i32 = arith.constant 0 : i32
    return %arg0, %arg1 : i32, i32
  }
  func.func @transform_2(%arg0: i32, %arg1: i32) -> (i32, i32) {
    %c0_i32 = arith.constant 0 : i32
    return %arg0, %arg1 : i32, i32
  }
  func.func @transform_3(%arg0: i32, %arg1: i32) -> (i32, i32) {
    %c0_i32 = arith.constant 0 : i32
    return %arg0, %arg1 : i32, i32
  }
}

</mosaic_0001>

<llo_original>
// kernel: negative_binomial_loss_log_ver.1
$region0: #{negative_binomial_loss_log_ver.1}
  #allocation0 [shape = 'u32[]', space=smem, size = 0x4, offset = 0x4, fixed_abs, tag = 'smem constant byte address 0x4 - core index']
  #allocation1 [shape = 'u32[144,128]{1,0:T(1,128)}', space=vmem, size = 0x12000, scoped, tag = 'internal scratch']
  %s0 = inlined_call_operand.hbm [shape: f32[16,256], index: 0, kind: input, shape index: {}]
  %s1 = inlined_call_operand.hbm [shape: f32[16,256], index: 1, kind: input, shape index: {}]
  %s2 = inlined_call_operand.hbm [shape: f32[16,256], index: 2, kind: input, shape index: {}]
  %s3 = inlined_call_operand.vmem [shape: f32[8,128], index: 3, kind: output, shape index: {}]
  %s4 = sld [smem:[#allocation0]]
  $region34: #{negative_binomial_loss_log_ver.1} parent=0
    _
  %s6 = ssub.s32 1, %s4
  %s7 = scalar_select 0, %s6, %s4
  $region1: #{negative_binomial_loss_log_ver.1} parent=0
    #allocation2 [shape = 'u8[16384]{0}', space=vmem, size = 0x4000, scoped, tag = 'input window, operand 0, single buffered']
    #allocation3 [shape = 's32[1]{0}', space=sflag, size = 0x4, scoped, tag = 'scoped memory for negative_binomial_loss_log_ver.1']
    #allocation4 [shape = 'u8[16384]{0}', space=vmem, size = 0x4000, scoped, tag = 'input window, operand 1, single buffered']
    #allocation5 [shape = 's32[1]{0}', space=sflag, size = 0x4, scoped, tag = 'scoped memory for negative_binomial_loss_log_ver.1']
    #allocation6 [shape = 'u8[16384]{0}', space=vmem, size = 0x4000, scoped, tag = 'input window, operand 2, single buffered']
    %8 = vsyncpa [#allocation3], 0
    %9 = vsyncpa [#allocation5], 0
    // Predicated region
    $region2: #{negative_binomial_loss_log_ver.1} parent=1 // pred_check
      _
    $region3: #{negative_binomial_loss_log_ver.1} parent=1 // pred_check_branch
      %11 = sbr.rel (0) target = $region5
    $region4: #{negative_binomial_loss_log_ver.1} parent=1 // pred_region
      %s13 = ssub.s32 512, 512
      %14 = vsyncadd [#allocation3], %s13
      %s15 = sshll.u32 [#allocation2], 4
      %s16 = int_to_ptr.vmem [resolvable:$true] %s15
      %21 = dma.hbm_to_vmem [thread:$0]  %s0, 512, %s16, [#allocation3], 256, 256, 16
    $region5: #{negative_binomial_loss_log_ver.1} parent=1 // pred_fallthru
      _
    // Predicated region
    $region6: #{negative_binomial_loss_log_ver.1} parent=1 // pred_check
      _
    $region7: #{negative_binomial_loss_log_ver.1} parent=1 // pred_check_branch
      %23 = sbr.rel (0) target = $region9
    $region8: #{negative_binomial_loss_log_ver.1} parent=1 // pred_region
      %s25 = ssub.s32 512, 512
      %26 = vsyncadd [#allocation5], %s25
      %s27 = sshll.u32 [#allocation4], 4
      %s28 = int_to_ptr.vmem [resolvable:$true] %s27
      %33 = dma.hbm_to_vmem [thread:$0]  %s1, 512, %s28, [#allocation5], 256, 256, 16
    $region9: #{negative_binomial_loss_log_ver.1} parent=1 // pred_fallthru
      _
    // Predicated region
    $region10: #{negative_binomial_loss_log_ver.1} parent=1 // pred_check
      _
    $region11: #{negative_binomial_loss_log_ver.1} parent=1 // pred_check_branch
      %35 = sbr.rel (0) target = $region13
    $region12: #{negative_binomial_loss_log_ver.1} parent=1 // pred_region
      %s37 = ssub.s32 512, 512
      %38 = vsyncadd [#allocation5], %s37
      %s39 = sshll.u32 [#allocation6], 4
      %s40 = int_to_ptr.vmem [resolvable:$true] %s39
      %45 = dma.hbm_to_vmem [thread:$0]  %s2, 512, %s40, [#allocation5], 256, 256, 16
    $region13: #{negative_binomial_loss_log_ver.1} parent=1 // pred_fallthru
      _
    // Predicated region
    $region14: #{negative_binomial_loss_log_ver.1} parent=1 // pred_check
      _
    $region15: #{negative_binomial_loss_log_ver.1} parent=1 // pred_check_branch
      %47 = sbr.rel (0) target = $region17
    $region16: #{negative_binomial_loss_log_ver.1} parent=1 // pred_region
      %48 = dma.done [#allocation3], 512
    $region17: #{negative_binomial_loss_log_ver.1} parent=1 // pred_fallthru
      _
    // Predicated region
    $region18: #{negative_binomial_loss_log_ver.1} parent=1 // pred_check
      _
    $region19: #{negative_binomial_loss_log_ver.1} parent=1 // pred_check_branch
      %50 = sbr.rel (0) target = $region21
    $region20: #{negative_binomial_loss_log_ver.1} parent=1 // pred_region
      %51 = dma.done [#allocation5], 512
    $region21: #{negative_binomial_loss_log_ver.1} parent=1 // pred_fallthru
      _
    // Predicated region
    $region22: #{negative_binomial_loss_log_ver.1} parent=1 // pred_check
      _
    $region23: #{negative_binomial_loss_log_ver.1} parent=1 // pred_check_branch
      %53 = sbr.rel (0) target = $region25
    $region24: #{negative_binomial_loss_log_ver.1} parent=1 // pred_region
      %54 = dma.done [#allocation5], 512
    $region25: #{negative_binomial_loss_log_ver.1} parent=1 // pred_fallthru
      _
    %v55 = vld [vmem:[#allocation2] sm:$0xff]
    %v56 = vld [vmem:[#allocation2 + $0x8] sm:$0xff]
    %v57 = vld [vmem:[#allocation2 + $0x10] sm:$0xff]
    %v58 = vld [vmem:[#allocation2 + $0x18] sm:$0xff]
    %v59 = vld [vmem:[#allocation4] sm:$0xff]
    %v60 = vld [vmem:[#allocation4 + $0x8] sm:$0xff]
    %v61 = vld [vmem:[#allocation4 + $0x10] sm:$0xff]
    %v62 = vld [vmem:[#allocation4 + $0x18] sm:$0xff]
    %v63 = vld [vmem:[#allocation6] sm:$0xff]
    %v64 = vld [vmem:[#allocation6 + $0x8] sm:$0xff]
    %v65 = vld [vmem:[#allocation6 + $0x10] sm:$0xff]
    %v66 = vld [vmem:[#allocation6 + $0x18] sm:$0xff]
    %v67 = vmul.f32 %v63, 1.442695
    %v68 = vpow.pop %v67
    %v69 = vmul.f32 %v64, 1.442695
    %v70 = vpow.pop %v69
    %v71 = vmul.f32 %v65, 1.442695
    %v72 = vpow.pop %v71
    %v73 = vmul.f32 %v66, 1.442695
    %v74 = vpow.pop %v73
    %v75 = vmax.f32 %v63, %v59
    %v76 = vmax.f32 %v64, %v60
    %v77 = vmax.f32 %v65, %v61
    %v78 = vmax.f32 %v66, %v62
    %v79 = vsub.f32 %v63, %v59
    %v80 = vsub.f32 %v64, %v60
    %v81 = vsub.f32 %v65, %v61
    %v82 = vsub.f32 %v66, %v62
    %v83 = vand.u32 2147483647, %v79
    %v84 = vand.u32 2147483647, %v80
    %v85 = vand.u32 2147483647, %v81
    %v86 = vand.u32 2147483647, %v82
    %v87 = vsub.f32 0.0, %v83
    %v88 = vsub.f32 0.0, %v84
    %v89 = vsub.f32 0.0, %v85
    %v90 = vsub.f32 0.0, %v86
    %v91 = vmul.f32 %v87, 1.442695
    %v92 = vpow.pop %v91
    %v93 = vmul.f32 %v88, 1.442695
    %v94 = vpow.pop %v93
    %v95 = vmul.f32 %v89, 1.442695
    %v96 = vpow.pop %v95
    %v97 = vmul.f32 %v90, 1.442695
    %v98 = vpow.pop %v97
    %v99 = vadd.f32 %v92, 1.0
    %v100 = vadd.f32 %v94, 1.0
    %v101 = vadd.f32 %v96, 1.0
    %v102 = vadd.f32 %v98, 1.0
    %v103 = vlog2.pop %v99
    %v104 = vmul.f32 %v103, 0.6931472
    %v105 = vlog2.pop %v100
    %v106 = vmul.f32 %v105, 0.6931472
    %v107 = vlog2.pop %v101
    %v108 = vmul.f32 %v107, 0.6931472
    %v109 = vlog2.pop %v102
    %v110 = vmul.f32 %v109, 0.6931472
    %v111 = vadd.f32 %v75, %v104
    %v112 = vadd.f32 %v76, %v106
    %v113 = vadd.f32 %v77, %v108
    %v114 = vadd.f32 %v78, %v110
    %v115 = vadd.f32 %v55, %v68
    %v116 = vadd.f32 %v56, %v70
    %v117 = vadd.f32 %v57, %v72
    %v118 = vadd.f32 %v58, %v74
    %v119 = vadd.f32 %v115, 1.0
    %v120 = vadd.f32 %v116, 1.0
    %v121 = vadd.f32 %v117, 1.0
    %v122 = vadd.f32 %v118, 1.0
    %v123 = vrcp.pop %v119
    %v124 = vmul.f32 1.0, %v123
    %v125 = vrcp.pop %v120
    %v126 = vmul.f32 1.0, %v125
    %v127 = vrcp.pop %v121
    %v128 = vmul.f32 1.0, %v127
    %v129 = vrcp.pop %v122
    %v130 = vmul.f32 1.0, %v129
    %v131 = vmul.f32 %v124, 3409662.8
    %v132 = vmul.f32 %v126, 3409662.8
    %v133 = vmul.f32 %v128, 3409662.8
    %v134 = vmul.f32 %v130, 3409662.8
    %v135 = vadd.f32 %v131, 4157348.0
    %v136 = vadd.f32 %v132, 4157348.0
    %v137 = vadd.f32 %v133, 4157348.0
    %v138 = vadd.f32 %v134, 4157348.0
    %v139 = vmul.f32 %v135, %v124
    %v140 = vmul.f32 %v136, %v126
    %v141 = vmul.f32 %v137, %v128
    %v142 = vmul.f32 %v138, %v130
    %v143 = vadd.f32 %v139, 2209812.5
    %v144 = vadd.f32 %v140, 2209812.5
    %v145 = vadd.f32 %v141, 2209812.5
    %v146 = vadd.f32 %v142, 2209812.5
    %v147 = vmul.f32 %v143, %v124
    %v148 = vmul.f32 %v144, %v126
    %v149 = vmul.f32 %v145, %v128
    %v150 = vmul.f32 %v146, %v130
    %v151 = vadd.f32 %v147, 665157.7
    %v152 = vadd.f32 %v148, 665157.7
    %v153 = vadd.f32 %v149, 665157.7
    %v154 = vadd.f32 %v150, 665157.7
    %v155 = vmul.f32 %v151, %v124
    %v156 = vmul.f32 %v152, %v126
    %v157 = vmul.f32 %v153, %v128
    %v158 = vmul.f32 %v154, %v130
    %v159 = vadd.f32 %v155, 122578.26
    %v160 = vadd.f32 %v156, 122578.26
    %v161 = vadd.f32 %v157, 122578.26
    %v162 = vadd.f32 %v158, 122578.26
    %v163 = vmul.f32 %v159, %v124
    %v164 = vmul.f32 %v160, %v126
    %v165 = vmul.f32 %v161, %v128
    %v166 = vmul.f32 %v162, %v130
    %v167 = vadd.f32 %v163, 13824.881
    %v168 = vadd.f32 %v164, 13824.881
    %v169 = vadd.f32 %v165, 13824.881
    %v170 = vadd.f32 %v166, 13824.881
    %v171 = vmul.f32 %v167, %v124
    %v172 = vmul.f32 %v168, %v126
    %v173 = vmul.f32 %v169, %v128
    %v174 = vmul.f32 %v170, %v130
    %v175 = vadd.f32 %v171, 881.8342
    %v176 = vadd.f32 %v172, 881.8342
    %v177 = vadd.f32 %v173, 881.8342
    %v178 = vadd.f32 %v174, 881.8342
    %v179 = vmul.f32 %v175, %v124
    %v180 = vmul.f32 %v176, %v126
    %v181 = vmul.f32 %v177, %v128
    %v182 = vmul.f32 %v178, %v130
    %v183 = vadd.f32 %v179, 24.458334
    %v184 = vadd.f32 %v180, 24.458334
    %v185 = vadd.f32 %v181, 24.458334
    %v186 = vadd.f32 %v182, 24.458334
    %v187 = vmul.f32 %v124, 5040.0
    %v188 = vmul.f32 %v126, 5040.0
    %v189 = vmul.f32 %v128, 5040.0
    %v190 = vmul.f32 %v130, 5040.0
    %v191 = vadd.f32 %v187, 13068.0
    %v192 = vadd.f32 %v188, 13068.0
    %v193 = vadd.f32 %v189, 13068.0
    %v194 = vadd.f32 %v190, 13068.0
    %v195 = vmul.f32 %v191, %v124
    %v196 = vmul.f32 %v192, %v126
    %v197 = vmul.f32 %v193, %v128
    %v198 = vmul.f32 %v194, %v130
    %v199 = vadd.f32 %v195, 13132.0
    %v200 = vadd.f32 %v196, 13132.0
    %v201 = vadd.f32 %v197, 13132.0
    %v202 = vadd.f32 %v198, 13132.0
    %v203 = vmul.f32 %v199, %v124
    %v204 = vmul.f32 %v200, %v126
    %v205 = vmul.f32 %v201, %v128
    %v206 = vmul.f32 %v202, %v130
    %v207 = vadd.f32 %v203, 6769.0
    %v208 = vadd.f32 %v204, 6769.0
    %v209 = vadd.f32 %v205, 6769.0
    %v210 = vadd.f32 %v206, 6769.0
    %v211 = vmul.f32 %v207, %v124
    %v212 = vmul.f32 %v208, %v126
    %v213 = vmul.f32 %v209, %v128
    %v214 = vmul.f32 %v210, %v130
    %v215 = vadd.f32 %v211, 1960.0
    %v216 = vadd.f32 %v212, 1960.0
    %v217 = vadd.f32 %v213, 1960.0
    %v218 = vadd.f32 %v214, 1960.0
    %v219 = vmul.f32 %v215, %v124
    %v220 = vmul.f32 %v216, %v126
    %v221 = vmul.f32 %v217, %v128
    %v222 = vmul.f32 %v218, %v130
    %v223 = vadd.f32 %v219, 322.0
    %v224 = vadd.f32 %v220, 322.0
    %v225 = vadd.f32 %v221, 322.0
    %v226 = vadd.f32 %v222, 322.0
    %v227 = vmul.f32 %v223, %v124
    %v228 = vmul.f32 %v224, %v126
    %v229 = vmul.f32 %v225, %v128
    %v230 = vmul.f32 %v226, %v130
    %v231 = vadd.f32 %v227, 28.0
    %v232 = vadd.f32 %v228, 28.0
    %v233 = vadd.f32 %v229, 28.0
    %v234 = vadd.f32 %v230, 28.0
    %v235 = vmul.f32 %v231, %v124
    %v236 = vmul.f32 %v232, %v126
    %v237 = vmul.f32 %v233, %v128
    %v238 = vmul.f32 %v234, %v130
    %v239 = vadd.f32 %v235, 1.0
    %v240 = vadd.f32 %v236, 1.0
    %v241 = vadd.f32 %v237, 1.0
    %v242 = vadd.f32 %v238, 1.0
    %v243 = vrcp.pop %v239
    %v244 = vmul.f32 %v183, %v243
    %v245 = vrcp.pop %v240
    %v246 = vmul.f32 %v184, %v245
    %v247 = vrcp.pop %v241
    %v248 = vmul.f32 %v185, %v247
    %v249 = vrcp.pop %v242
    %v250 = vmul.f32 %v186, %v249
    %v251 = vmul.f32 %v124, %v244
    %v252 = vmul.f32 %v126, %v246
    %v253 = vmul.f32 %v128, %v248
    %v254 = vmul.f32 %v130, %v250
    %v255 = vadd.f32 %v251, 1.0
    %v256 = vadd.f32 %v252, 1.0
    %v257 = vadd.f32 %v253, 1.0
    %v258 = vadd.f32 %v254, 1.0
    %v259 = vadd.f32 %v115, 7.5
    %v260 = vadd.f32 %v116, 7.5
    %v261 = vadd.f32 %v117, 7.5
    %v262 = vadd.f32 %v118, 7.5
    %v263 = vadd.f32 %v115, 0.5
    %v264 = vadd.f32 %v116, 0.5
    %v265 = vadd.f32 %v117, 0.5
    %v266 = vadd.f32 %v118, 0.5
    %v267 = vlog2.pop %v259
    %v268 = vmul.f32 %v267, 0.6931472
    %v269 = vlog2.pop %v260
    %v270 = vmul.f32 %v269, 0.6931472
    %v271 = vlog2.pop %v261
    %v272 = vmul.f32 %v271, 0.6931472
    %v273 = vlog2.pop %v262
    %v274 = vmul.f32 %v273, 0.6931472
    %v275 = vmul.f32 %v263, %v268
    %v276 = vmul.f32 %v264, %v270
    %v277 = vmul.f32 %v265, %v272
    %v278 = vmul.f32 %v266, %v274
    %v279 = vadd.f32 %v275, 0.9189385
    %v280 = vadd.f32 %v276, 0.9189385
    %v281 = vadd.f32 %v277, 0.9189385
    %v282 = vadd.f32 %v278, 0.9189385
    %v283 = vsub.f32 %v279, %v259
    %v284 = vsub.f32 %v280, %v260
    %v285 = vsub.f32 %v281, %v261
    %v286 = vsub.f32 %v282, %v262
    %v287 = vlog2.pop %v255
    %v288 = vmul.f32 %v287, 0.6931472
    %v289 = vlog2.pop %v256
    %v290 = vmul.f32 %v289, 0.6931472
    %v291 = vlog2.pop %v257
    %v292 = vmul.f32 %v291, 0.6931472
    %v293 = vlog2.pop %v258
    %v294 = vmul.f32 %v293, 0.6931472
    %v295 = vadd.f32 %v283, %v288
    %v296 = vadd.f32 %v284, %v290
    %v297 = vadd.f32 %v285, %v292
    %v298 = vadd.f32 %v286, %v294
    %v299 = vlog2.pop %v115
    %v300 = vmul.f32 %v299, 0.6931472
    %v301 = vlog2.pop %v116
    %v302 = vmul.f32 %v301, 0.6931472
    %v303 = vlog2.pop %v117
    %v304 = vmul.f32 %v303, 0.6931472
    %v305 = vlog2.pop %v118
    %v306 = vmul.f32 %v305, 0.6931472
    %v307 = vsub.f32 %v295, %v300
    %v308 = vsub.f32 %v296, %v302
    %v309 = vsub.f32 %v297, %v304
    %v310 = vsub.f32 %v298, %v306
    %v311 = vadd.f32 %v68, 1.0
    %v312 = vadd.f32 %v70, 1.0
    %v313 = vadd.f32 %v72, 1.0
    %v314 = vadd.f32 %v74, 1.0
    %v315 = vrcp.pop %v311
    %v316 = vmul.f32 1.0, %v315
    %v317 = vrcp.pop %v312
    %v318 = vmul.f32 1.0, %v317
    %v319 = vrcp.pop %v313
    %v320 = vmul.f32 1.0, %v319
    %v321 = vrcp.pop %v314
    %v322 = vmul.f32 1.0, %v321
    %v323 = vmul.f32 %v316, 3409662.8
    %v324 = vmul.f32 %v318, 3409662.8
    %v325 = vmul.f32 %v320, 3409662.8
    %v326 = vmul.f32 %v322, 3409662.8
    %v327 = vadd.f32 %v323, 4157348.0
    %v328 = vadd.f32 %v324, 4157348.0
    %v329 = vadd.f32 %v325, 4157348.0
    %v330 = vadd.f32 %v326, 4157348.0
    %v331 = vmul.f32 %v327, %v316
    %v332 = vmul.f32 %v328, %v318
    %v333 = vmul.f32 %v329, %v320
    %v334 = vmul.f32 %v330, %v322
    %v335 = vadd.f32 %v331, 2209812.5
    %v336 = vadd.f32 %v332, 2209812.5
    %v337 = vadd.f32 %v333, 2209812.5
    %v338 = vadd.f32 %v334, 2209812.5
    %v339 = vmul.f32 %v335, %v316
    %v340 = vmul.f32 %v336, %v318
    %v341 = vmul.f32 %v337, %v320
    %v342 = vmul.f32 %v338, %v322
    %v343 = vadd.f32 %v339, 665157.7
    %v344 = vadd.f32 %v340, 665157.7
    %v345 = vadd.f32 %v341, 665157.7
    %v346 = vadd.f32 %v342, 665157.7
    %v347 = vmul.f32 %v343, %v316
    %v348 = vmul.f32 %v344, %v318
    %v349 = vmul.f32 %v345, %v320
    %v350 = vmul.f32 %v346, %v322
    %v351 = vadd.f32 %v347, 122578.26
    %v352 = vadd.f32 %v348, 122578.26
    %v353 = vadd.f32 %v349, 122578.26
    %v354 = vadd.f32 %v350, 122578.26
    %v355 = vmul.f32 %v351, %v316
    %v356 = vmul.f32 %v352, %v318
    %v357 = vmul.f32 %v353, %v320
    %v358 = vmul.f32 %v354, %v322
    %v359 = vadd.f32 %v355, 13824.881
    %v360 = vadd.f32 %v356, 13824.881
    %v361 = vadd.f32 %v357, 13824.881
    %v362 = vadd.f32 %v358, 13824.881
    %v363 = vmul.f32 %v359, %v316
    %v364 = vmul.f32 %v360, %v318
    %v365 = vmul.f32 %v361, %v320
    %v366 = vmul.f32 %v362, %v322
    %v367 = vadd.f32 %v363, 881.8342
    %v368 = vadd.f32 %v364, 881.8342
    %v369 = vadd.f32 %v365, 881.8342
    %v370 = vadd.f32 %v366, 881.8342
    %v371 = vmul.f32 %v367, %v316
    %v372 = vmul.f32 %v368, %v318
    %v373 = vmul.f32 %v369, %v320
    %v374 = vmul.f32 %v370, %v322
    %v375 = vadd.f32 %v371, 24.458334
    %v376 = vadd.f32 %v372, 24.458334
    %v377 = vadd.f32 %v373, 24.458334
    %v378 = vadd.f32 %v374, 24.458334
    %v379 = vmul.f32 %v316, 5040.0
    %v380 = vmul.f32 %v318, 5040.0
    %v381 = vmul.f32 %v320, 5040.0
    %v382 = vmul.f32 %v322, 5040.0
    %v383 = vadd.f32 %v379, 13068.0
    %v384 = vadd.f32 %v380, 13068.0
    %v385 = vadd.f32 %v381, 13068.0
    %v386 = vadd.f32 %v382, 13068.0
    %v387 = vmul.f32 %v383, %v316
    %v388 = vmul.f32 %v384, %v318
    %v389 = vmul.f32 %v385, %v320
    %v390 = vmul.f32 %v386, %v322
    %v391 = vadd.f32 %v387, 13132.0
    %v392 = vadd.f32 %v388, 13132.0
    %v393 = vadd.f32 %v389, 13132.0
    %v394 = vadd.f32 %v390, 13132.0
    %v395 = vmul.f32 %v391, %v316
    %v396 = vmul.f32 %v392, %v318
    %v397 = vmul.f32 %v393, %v320
    %v398 = vmul.f32 %v394, %v322
    %v399 = vadd.f32 %v395, 6769.0
    %v400 = vadd.f32 %v396, 6769.0
    %v401 = vadd.f32 %v397, 6769.0
    %v402 = vadd.f32 %v398, 6769.0
    %v403 = vmul.f32 %v399, %v316
    %v404 = vmul.f32 %v400, %v318
    %v405 = vmul.f32 %v401, %v320
    %v406 = vmul.f32 %v402, %v322
    %v407 = vadd.f32 %v403, 1960.0
    %v408 = vadd.f32 %v404, 1960.0
    %v409 = vadd.f32 %v405, 1960.0
    %v410 = vadd.f32 %v406, 1960.0
    %v411 = vmul.f32 %v407, %v316
    %v412 = vmul.f32 %v408, %v318
    %v413 = vmul.f32 %v409, %v320
    %v414 = vmul.f32 %v410, %v322
    %v415 = vadd.f32 %v411, 322.0
    %v416 = vadd.f32 %v412, 322.0
    %v417 = vadd.f32 %v413, 322.0
    %v418 = vadd.f32 %v414, 322.0
    %v419 = vmul.f32 %v415, %v316
    %v420 = vmul.f32 %v416, %v318
    %v421 = vmul.f32 %v417, %v320
    %v422 = vmul.f32 %v418, %v322
    %v423 = vadd.f32 %v419, 28.0
    %v424 = vadd.f32 %v420, 28.0
    %v425 = vadd.f32 %v421, 28.0
    %v426 = vadd.f32 %v422, 28.0
    %v427 = vmul.f32 %v423, %v316
    %v428 = vmul.f32 %v424, %v318
    %v429 = vmul.f32 %v425, %v320
    %v430 = vmul.f32 %v426, %v322
    %v431 = vadd.f32 %v427, 1.0
    %v432 = vadd.f32 %v428, 1.0
    %v433 = vadd.f32 %v429, 1.0
    %v434 = vadd.f32 %v430, 1.0
    %v435 = vrcp.pop %v431
    %v436 = vmul.f32 %v375, %v435
    %v437 = vrcp.pop %v432
    %v438 = vmul.f32 %v376, %v437
    %v439 = vrcp.pop %v433
    %v440 = vmul.f32 %v377, %v439
    %v441 = vrcp.pop %v434
    %v442 = vmul.f32 %v378, %v441
    %v443 = vmul.f32 %v316, %v436
    %v444 = vmul.f32 %v318, %v438
    %v445 = vmul.f32 %v320, %v440
    %v446 = vmul.f32 %v322, %v442
    %v447 = vadd.f32 %v443, 1.0
    %v448 = vadd.f32 %v444, 1.0
    %v449 = vadd.f32 %v445, 1.0
    %v450 = vadd.f32 %v446, 1.0
    %v451 = vadd.f32 %v68, 7.5
    %v452 = vadd.f32 %v70, 7.5
    %v453 = vadd.f32 %v72, 7.5
    %v454 = vadd.f32 %v74, 7.5
    %v455 = vadd.f32 %v68, 0.5
    %v456 = vadd.f32 %v70, 0.5
    %v457 = vadd.f32 %v72, 0.5
    %v458 = vadd.f32 %v74, 0.5
    %v459 = vlog2.pop %v451
    %v460 = vmul.f32 %v459, 0.6931472
    %v461 = vlog2.pop %v452
    %v462 = vmul.f32 %v461, 0.6931472
    %v463 = vlog2.pop %v453
    %v464 = vmul.f32 %v463, 0.6931472
    %v465 = vlog2.pop %v454
    %v466 = vmul.f32 %v465, 0.6931472
    %v467 = vmul.f32 %v455, %v460
    %v468 = vmul.f32 %v456, %v462
    %v469 = vmul.f32 %v457, %v464
    %v470 = vmul.f32 %v458, %v466
    %v471 = vadd.f32 %v467, 0.9189385
    %v472 = vadd.f32 %v468, 0.9189385
    %v473 = vadd.f32 %v469, 0.9189385
    %v474 = vadd.f32 %v470, 0.9189385
    %v475 = vsub.f32 %v471, %v451
    %v476 = vsub.f32 %v472, %v452
    %v477 = vsub.f32 %v473, %v453
    %v478 = vsub.f32 %v474, %v454
    %v479 = vlog2.pop %v447
    %v480 = vmul.f32 %v479, 0.6931472
    %v481 = vlog2.pop %v448
    %v482 = vmul.f32 %v481, 0.6931472
    %v483 = vlog2.pop %v449
    %v484 = vmul.f32 %v483, 0.6931472
    %v485 = vlog2.pop %v450
    %v486 = vmul.f32 %v485, 0.6931472
    %v487 = vadd.f32 %v475, %v480
    %v488 = vadd.f32 %v476, %v482
    %v489 = vadd.f32 %v477, %v484
    %v490 = vadd.f32 %v478, %v486
    %v491 = vlog2.pop %v68
    %v492 = vmul.f32 %v491, 0.6931472
    %v493 = vlog2.pop %v70
    %v494 = vmul.f32 %v493, 0.6931472
    %v495 = vlog2.pop %v72
    %v496 = vmul.f32 %v495, 0.6931472
    %v497 = vlog2.pop %v74
    %v498 = vmul.f32 %v497, 0.6931472
    %v499 = vsub.f32 %v487, %v492
    %v500 = vsub.f32 %v488, %v494
    %v501 = vsub.f32 %v489, %v496
    %v502 = vsub.f32 %v490, %v498
    %v503 = vsub.f32 %v307, %v499
    %v504 = vsub.f32 %v308, %v500
    %v505 = vsub.f32 %v309, %v501
    %v506 = vsub.f32 %v310, %v502
    %v507 = vadd.f32 %v55, 1.0
    %v508 = vadd.f32 %v56, 1.0
    %v509 = vadd.f32 %v57, 1.0
    %v510 = vadd.f32 %v58, 1.0
    %v511 = vrcp.pop %v507
    %v512 = vmul.f32 1.0, %v511
    %v513 = vrcp.pop %v508
    %v514 = vmul.f32 1.0, %v513
    %v515 = vrcp.pop %v509
    %v516 = vmul.f32 1.0, %v515
    %v517 = vrcp.pop %v510
    %v518 = vmul.f32 1.0, %v517
    %v519 = vmul.f32 %v512, 3409662.8
    %v520 = vmul.f32 %v514, 3409662.8
    %v521 = vmul.f32 %v516, 3409662.8
    %v522 = vmul.f32 %v518, 3409662.8
    %v523 = vadd.f32 %v519, 4157348.0
    %v524 = vadd.f32 %v520, 4157348.0
    %v525 = vadd.f32 %v521, 4157348.0
    %v526 = vadd.f32 %v522, 4157348.0
    %v527 = vmul.f32 %v523, %v512
    %v528 = vmul.f32 %v524, %v514
    %v529 = vmul.f32 %v525, %v516
    %v530 = vmul.f32 %v526, %v518
    %v531 = vadd.f32 %v527, 2209812.5
    %v532 = vadd.f32 %v528, 2209812.5
    %v533 = vadd.f32 %v529, 2209812.5
    %v534 = vadd.f32 %v530, 2209812.5
    %v535 = vmul.f32 %v531, %v512
    %v536 = vmul.f32 %v532, %v514
    %v537 = vmul.f32 %v533, %v516
    %v538 = vmul.f32 %v534, %v518
    %v539 = vadd.f32 %v535, 665157.7
    %v540 = vadd.f32 %v536, 665157.7
    %v541 = vadd.f32 %v537, 665157.7
    %v542 = vadd.f32 %v538, 665157.7
    %v543 = vmul.f32 %v539, %v512
    %v544 = vmul.f32 %v540, %v514
    %v545 = vmul.f32 %v541, %v516
    %v546 = vmul.f32 %v542, %v518
    %v547 = vadd.f32 %v543, 122578.26
    %v548 = vadd.f32 %v544, 122578.26
    %v549 = vadd.f32 %v545, 122578.26
    %v550 = vadd.f32 %v546, 122578.26
    %v551 = vmul.f32 %v547, %v512
    %v552 = vmul.f32 %v548, %v514
    %v553 = vmul.f32 %v549, %v516
    %v554 = vmul.f32 %v550, %v518
    %v555 = vadd.f32 %v551, 13824.881
    %v556 = vadd.f32 %v552, 13824.881
    %v557 = vadd.f32 %v553, 13824.881
    %v558 = vadd.f32 %v554, 13824.881
    %v559 = vmul.f32 %v555, %v512
    %v560 = vmul.f32 %v556, %v514
    %v561 = vmul.f32 %v557, %v516
    %v562 = vmul.f32 %v558, %v518
    %v563 = vadd.f32 %v559, 881.8342
    %v564 = vadd.f32 %v560, 881.8342
    %v565 = vadd.f32 %v561, 881.8342
    %v566 = vadd.f32 %v562, 881.8342
    %v567 = vmul.f32 %v563, %v512
    %v568 = vmul.f32 %v564, %v514
    %v569 = vmul.f32 %v565, %v516
    %v570 = vmul.f32 %v566, %v518
    %v571 = vadd.f32 %v567, 24.458334
    %v572 = vadd.f32 %v568, 24.458334
    %v573 = vadd.f32 %v569, 24.458334
    %v574 = vadd.f32 %v570, 24.458334
    %v575 = vmul.f32 %v512, 5040.0
    %v576 = vmul.f32 %v514, 5040.0
    %v577 = vmul.f32 %v516, 5040.0
    %v578 = vmul.f32 %v518, 5040.0
    %v579 = vadd.f32 %v575, 13068.0
    %v580 = vadd.f32 %v576, 13068.0
    %v581 = vadd.f32 %v577, 13068.0
    %v582 = vadd.f32 %v578, 13068.0
    %v583 = vmul.f32 %v579, %v512
    %v584 = vmul.f32 %v580, %v514
    %v585 = vmul.f32 %v581, %v516
    %v586 = vmul.f32 %v582, %v518
    %v587 = vadd.f32 %v583, 13132.0
    %v588 = vadd.f32 %v584, 13132.0
    %v589 = vadd.f32 %v585, 13132.0
    %v590 = vadd.f32 %v586, 13132.0
    %v591 = vmul.f32 %v587, %v512
    %v592 = vmul.f32 %v588, %v514
    %v593 = vmul.f32 %v589, %v516
    %v594 = vmul.f32 %v590, %v518
    %v595 = vadd.f32 %v591, 6769.0
    %v596 = vadd.f32 %v592, 6769.0
    %v597 = vadd.f32 %v593, 6769.0
    %v598 = vadd.f32 %v594, 6769.0
    %v599 = vmul.f32 %v595, %v512
    %v600 = vmul.f32 %v596, %v514
    %v601 = vmul.f32 %v597, %v516
    %v602 = vmul.f32 %v598, %v518
    %v603 = vadd.f32 %v599, 1960.0
    %v604 = vadd.f32 %v600, 1960.0
    %v605 = vadd.f32 %v601, 1960.0
    %v606 = vadd.f32 %v602, 1960.0
    %v607 = vmul.f32 %v603, %v512
    %v608 = vmul.f32 %v604, %v514
    %v609 = vmul.f32 %v605, %v516
    %v610 = vmul.f32 %v606, %v518
    %v611 = vadd.f32 %v607, 322.0
    %v612 = vadd.f32 %v608, 322.0
    %v613 = vadd.f32 %v609, 322.0
    %v614 = vadd.f32 %v610, 322.0
    %v615 = vmul.f32 %v611, %v512
    %v616 = vmul.f32 %v612, %v514
    %v617 = vmul.f32 %v613, %v516
    %v618 = vmul.f32 %v614, %v518
    %v619 = vadd.f32 %v615, 28.0
    %v620 = vadd.f32 %v616, 28.0
    %v621 = vadd.f32 %v617, 28.0
    %v622 = vadd.f32 %v618, 28.0
    %v623 = vmul.f32 %v619, %v512
    %v624 = vmul.f32 %v620, %v514
    %v625 = vmul.f32 %v621, %v516
    %v626 = vmul.f32 %v622, %v518
    %v627 = vadd.f32 %v623, 1.0
    %v628 = vadd.f32 %v624, 1.0
    %v629 = vadd.f32 %v625, 1.0
    %v630 = vadd.f32 %v626, 1.0
    %v631 = vrcp.pop %v627
    %v632 = vmul.f32 %v571, %v631
    %v633 = vrcp.pop %v628
    %v634 = vmul.f32 %v572, %v633
    %v635 = vrcp.pop %v629
    %v636 = vmul.f32 %v573, %v635
    %v637 = vrcp.pop %v630
    %v638 = vmul.f32 %v574, %v637
    %v639 = vmul.f32 %v512, %v632
    %v640 = vmul.f32 %v514, %v634
    %v641 = vmul.f32 %v516, %v636
    %v642 = vmul.f32 %v518, %v638
    %v643 = vadd.f32 %v639, 1.0
    %v644 = vadd.f32 %v640, 1.0
    %v645 = vadd.f32 %v641, 1.0
    %v646 = vadd.f32 %v642, 1.0
    %v647 = vadd.f32 %v55, 7.5
    %v648 = vadd.f32 %v56, 7.5
    %v649 = vadd.f32 %v57, 7.5
    %v650 = vadd.f32 %v58, 7.5
    %v651 = vadd.f32 %v55, 0.5
    %v652 = vadd.f32 %v56, 0.5
    %v653 = vadd.f32 %v57, 0.5
    %v654 = vadd.f32 %v58, 0.5
    %v655 = vlog2.pop %v647
    %v656 = vmul.f32 %v655, 0.6931472
    %v657 = vlog2.pop %v648
    %v658 = vmul.f32 %v657, 0.6931472
    %v659 = vlog2.pop %v649
    %v660 = vmul.f32 %v659, 0.6931472
    %v661 = vlog2.pop %v650
    %v662 = vmul.f32 %v661, 0.6931472
    %v663 = vmul.f32 %v651, %v656
    %v664 = vmul.f32 %v652, %v658
    %v665 = vmul.f32 %v653, %v660
    %v666 = vmul.f32 %v654, %v662
    %v667 = vadd.f32 %v663, 0.9189385
    %v668 = vadd.f32 %v664, 0.9189385
    %v669 = vadd.f32 %v665, 0.9189385
    %v670 = vadd.f32 %v666, 0.9189385
    %v671 = vsub.f32 %v667, %v647
    %v672 = vsub.f32 %v668, %v648
    %v673 = vsub.f32 %v669, %v649
    %v674 = vsub.f32 %v670, %v650
    %v675 = vlog2.pop %v643
    %v676 = vmul.f32 %v675, 0.6931472
    %v677 = vlog2.pop %v644
    %v678 = vmul.f32 %v677, 0.6931472
    %v679 = vlog2.pop %v645
    %v680 = vmul.f32 %v679, 0.6931472
    %v681 = vlog2.pop %v646
    %v682 = vmul.f32 %v681, 0.6931472
    %v683 = vadd.f32 %v671, %v676
    %v684 = vadd.f32 %v672, %v678
    %v685 = vadd.f32 %v673, %v680
    %v686 = vadd.f32 %v674, %v682
    %v687 = vsub.f32 %v503, %v683
    %v688 = vsub.f32 %v504, %v684
    %v689 = vsub.f32 %v505, %v685
    %v690 = vsub.f32 %v506, %v686
    %v691 = vsub.f32 %v63, %v111
    %v692 = vsub.f32 %v64, %v112
    %v693 = vsub.f32 %v65, %v113
    %v694 = vsub.f32 %v66, %v114
    %v695 = vmul.f32 %v68, %v691
    %v696 = vmul.f32 %v70, %v692
    %v697 = vmul.f32 %v72, %v693
    %v698 = vmul.f32 %v74, %v694
    %v699 = vadd.f32 %v687, %v695
    %v700 = vadd.f32 %v688, %v696
    %v701 = vadd.f32 %v689, %v697
    %v702 = vadd.f32 %v690, %v698
    %v703 = vsub.f32 %v59, %v111
    %v704 = vsub.f32 %v60, %v112
    %v705 = vsub.f32 %v61, %v113
    %v706 = vsub.f32 %v62, %v114
    %v707 = vmul.f32 %v55, %v703
    %v708 = vmul.f32 %v56, %v704
    %v709 = vmul.f32 %v57, %v705
    %v710 = vmul.f32 %v58, %v706
    %v711 = vadd.f32 %v699, %v707
    %v712 = vadd.f32 %v700, %v708
    %v713 = vadd.f32 %v701, %v709
    %v714 = vadd.f32 %v702, %v710
    %v715 = vsub.f32 0.0, %v711
    %v716 = vsub.f32 0.0, %v712
    %v717 = vsub.f32 0.0, %v713
    %v718 = vsub.f32 0.0, %v714
    %v719 = vadd.f32 %v715, %v716
    %v720 = vadd.f32 %v719, %v717
    %v721 = vadd.f32 %v720, %v718
    %722 = vadd.xlane.f32.xlu0 %v721
    %v723 = vpop.xlane.xlu0 %722
    %v724 = vrot.slane %v723, 4
    %v725 = vadd.f32 %v723, %v724
    %v726 = vrot.slane %v725, 2
    %v727 = vadd.f32 %v725, %v726
    %v728 = vrot.slane %v727, 1
    %v729 = vadd.f32 %v727, %v728
    %s730 = vtos %v729
    %v731 = vlaneseq
    %v732 = vshrl.u32 %v731, 7
    %v733 = vlaneseq
    %v734 = vand.u32 %v733, 127
    %vm735 = vcmp.eq.s32.totalorder %v732, 0
    %vm736 = vcmp.eq.s32.totalorder %v734, 0
    %vm737 = vmand %vm735, %vm736
    %v738 = vstv %s730
    %v739 = vsel %vm737, %v738, 0.0
    %740 = vst [vmem:[%s3] sm:$0xff] %v739
    // Predicated region
    $region26: #{negative_binomial_loss_log_ver.1} parent=1 // pred_check
      _
    $region27: #{negative_binomial_loss_log_ver.1} parent=1 // pred_check_branch
      %742 = sbr.rel (0) target = $region29
    $region28: #{negative_binomial_loss_log_ver.1} parent=1 // pred_region
      _
    $region29: #{negative_binomial_loss_log_ver.1} parent=1 // pred_fallthru
      _
    // Predicated region
    $region30: #{negative_binomial_loss_log_ver.1} parent=1 // pred_check
      _
    $region31: #{negative_binomial_loss_log_ver.1} parent=1 // pred_check_branch
      %744 = sbr.rel (0) target = $region33
    $region32: #{negative_binomial_loss_log_ver.1} parent=1 // pred_region
      _
    $region33: #{negative_binomial_loss_log_ver.1} parent=1 // pred_fallthru
      _
    %745 = vsyncpa [#allocation3], 1
    %746 = vsyncpa [#allocation5], 1

</llo_original>
